<compile_context>
chip_gen: v5e
topology: v5e:2x2
jax: 0.10.0
libtpu: 0.0.40
codegen_flags: <defaults>
</compile_context>

<pallas_src>
import functools

import jax
import jax.numpy as jnp
from jax.experimental import pallas as pl
from jax.experimental.pallas import tpu as pltpu


_VPU_PROJECT_MAX_K = 16      # channel counts at or below this skip the MXU
_MAX_TP = 16384              # lane-tile cap (multiple of 128)


# ---------------------------------------------------------------------------
# In-kernel helpers
# ---------------------------------------------------------------------------
def _vpu_project(wT, v):
    """(F_int, C) x (C, TP) -> (F_int, TP) on the VPU via per-channel FMA.

    For tiny contractions (C <= 16) the MXU is <5% utilized and per-tile
    weight-latch / result-pop latency dominates; the VALU has huge slack in
    this HBM-bound kernel, so the unrolled broadcast-multiply-add is free.
    """
    C = v.shape[0]
    acc = wT[:, 0:1] * v[0:1, :]
    for c in range(1, C):
        acc = acc + wT[:, c:c + 1] * v[c:c + 1, :]
    return acc


def _project(wT, v):
    if v.shape[0] <= _VPU_PROJECT_MAX_K:
        return _vpu_project(wT, v)
    # MXU path: HIGHEST precision is free here (mem-bound) and matches the
    # f32 reference at large K.
    return jnp.dot(wT, v, preferred_element_type=jnp.float32,
                   precision=jax.lax.Precision.HIGHEST)


# ---------------------------------------------------------------------------
# Pallas kernel: one (batch-subblock, pixel-tile) block per grid step.
# ---------------------------------------------------------------------------
def _attention_gate_kernel(g_ref, x_ref, wgT_ref, wxT_ref, bgx_ref, wp_ref,
                           bp_ref, o_ref, *, nb):
    # Weights / biases are VMEM-resident (constant index maps); load once.
    wgT = wgT_ref[...]          # (F_int, F_g)  f32, BN folded
    wxT = wxT_ref[...]          # (F_int, F_l)  f32, BN folded
    bgx = bgx_ref[...]          # (F_int, 1)    fused bg+bx column
    wp = wp_ref[...]            # (F_int, 1)    psi weight column
    bp = bp_ref[0, 0]           # SMEM scalar   psi bias

    # Static unroll over the batch sub-block; each iteration is pure 2-D
    # (channels on sublanes, pixels on the 128-wide lane axis).
    for b in range(nb):
        g = g_ref[b].astype(jnp.float32)     # (F_g, TP) - f32 compute always
        x = x_ref[b].astype(jnp.float32)     # (F_l, TP)

        g1 = _project(wgT, g)                # 1x1 conv (+ folded BN)
        x1 = _project(wxT, x)
        p = jnp.maximum(g1 + x1 + bgx, 0.0)  # ReLU(g1 + x1 + fused bias)

        # psi has a single output channel -> VPU multiply + sublane reduce
        # instead of an N=1 MXU pass.
        logit = jnp.sum(p * wp, axis=0, keepdims=True) + bp
        psi = jax.nn.sigmoid(logit)          # (1, TP)

        o_ref[b] = (x * psi).astype(o_ref.dtype)   # lane-dense store


# ---------------------------------------------------------------------------
# Tiling / VMEM budgeting
# ---------------------------------------------------------------------------
def _vmem_limit_bytes():
    cap = 128 << 20
    try:
        cap = int(pltpu.get_tpu_info().vmem_capacity_bytes)
    except Exception:
        pass
    # 64 MiB on v5e/v6e (128 MiB physical); ~45 MiB on v7x (64 MiB physical)
    # so the double-buffered pipeline + internal scratch keep headroom.
    return min(64 << 20, int(cap * 0.70))


def _pick_tiles(N, P, F_g, F_l, F_int, itemsize, vmem_limit, force_tp=None):
    """Choose (nb, tp): batch sub-block and pixel-tile (lane) width.

    HBM-bandwidth-bound kernel -> the only lever is amortizing the ~0.35us
    per-grid-step overhead with the largest tile the VMEM budget allows.
    Footprint per pixel column per batch element:
      - double-buffered g / x / out blocks at the I/O dtype,
      - f32 upcast copies of g / x when the I/O dtype is sub-32-bit,
      - single-buffered f32 intermediates (g1, x1, p, psi, pre-cast out).
    """
    bytes_per_col = (2 * (F_g + 2 * F_l) * itemsize
                     + (3 * F_int + F_l + 1) * 4
                     + ((F_g + F_l) * 4 if itemsize < 4 else 0))
    cols_budget = max(128, int(vmem_limit * 0.70) // bytes_per_col)

    if force_tp is not None:
        return 1, int(force_tp)

    if P <= min(cols_budget, _MAX_TP):
        # Whole pixel extent in one step; amortize step overhead by blocking
        # several batch images per step (same lever as a bigger TP).
        tp = P
        nb = max(1, min(N, cols_budget // max(P, 1)))
        if N > 1:
            nb = min(nb, -(-N // 2))     # keep >=2 grid programs (megacore)
        elif P >= 256:
            # N == 1: split pixels in two so both TensorCores get work.
            tp = min(tp, ((P + 1) // 2 + 127) // 128 * 128)
        return nb, tp

    tp = max(128, min(_MAX_TP, (cols_budget // 128) * 128))
    return 1, tp


def _attention_gate_nchw(g3, x3, wgT, wxT, b_gx, wp_col, bp, force_tp=None):
    """g3: (N, F_g, P), x3: (N, F_l, P) -> (N, F_l, P), out dtype = x3.dtype."""
    N, F_g, P = g3.shape
    _, F_l, _ = x3.shape
    F_int = wgT.shape[0]
    g_item = jnp.dtype(g3.dtype).itemsize
    x_item = jnp.dtype(x3.dtype).itemsize
    itemsize = max(g_item, x_item)

    vmem_limit = _vmem_limit_bytes()
    nb, tp = _pick_tiles(N, P, F_g, F_l, F_int, itemsize, vmem_limit, force_tp)
    grid = (pl.cdiv(N, nb), pl.cdiv(P, tp))   # both axes independent/parallel

    wfull = lambda b, p: (0, 0)
    cost = pl.CostEstimate(
        flops=int(2 * N * P * F_int * (F_g + F_l + 1) + 4 * N * P * F_l),
        transcendentals=int(N * P),                       # sigmoid
        bytes_accessed=int(N * P * (F_g * g_item + F_l * x_item + F_l * x_item)
                           + 4 * F_int * (F_g + F_l + 3)),
    )

    kernel = functools.partial(_attention_gate_kernel, nb=nb)
    return pl.pallas_call(
        kernel,
        out_shape=jax.ShapeDtypeStruct((N, F_l, P), x3.dtype),
        grid=grid,
        in_specs=[
            pl.BlockSpec((nb, F_g, tp), lambda b, p: (b, 0, p)),     # g tile
            pl.BlockSpec((nb, F_l, tp), lambda b, p: (b, 0, p)),     # x tile
            pl.BlockSpec((F_int, F_g), wfull),                       # WgT_eff
            pl.BlockSpec((F_int, F_l), wfull),                       # WxT_eff
            pl.BlockSpec((F_int, 1), wfull),                         # bg+bx column
            pl.BlockSpec((F_int, 1), wfull),                         # psi weight col
            pl.BlockSpec(memory_space=pltpu.MemorySpace.SMEM),       # psi bias (1,1)
        ],
        out_specs=pl.BlockSpec((nb, F_l, tp), lambda b, p: (b, 0, p)),
        compiler_params=pltpu.CompilerParams(
            dimension_semantics=("parallel", "parallel"),
            vmem_limit_bytes=vmem_limit,
        ),
        cost_estimate=cost,
    )(g3, x3, wgT, wxT, b_gx, wp_col, bp)


# ---------------------------------------------------------------------------
# Parameter construction + BN folding (plain JAX glue, tiny tensors only).
# ---------------------------------------------------------------------------
def _fold_conv_bn(w, b, gamma, beta, mean, var, eps=1e-5):
    """Fold eval-mode BatchNorm into a 1x1 conv. w: (C_in, C_out), b: (C_out,)."""
    scale = gamma / jnp.sqrt(var + eps)
    w_eff = w * scale[None, :]
    b_eff = (b - mean) * scale + beta
    return w_eff, b_eff


def make_attention_block_params(key, F_g, F_l, F_int):
    ks = jax.random.split(key, 12)
    params = {
        # W_g: Conv2d(F_g, F_int, 1) + BN(F_int)
        "wg": jax.random.normal(ks[0], (F_g, F_int), jnp.float32) * 0.2,
        "bg": jax.random.normal(ks[1], (F_int,), jnp.float32) * 0.1,
        "gg": 1.0 + 0.1 * jax.random.normal(ks[2], (F_int,), jnp.float32),
        "betag": 0.05 * jax.random.normal(ks[3], (F_int,), jnp.float32),
        # W_x: Conv2d(F_l, F_int, 1) + BN(F_int)
        "wx": jax.random.normal(ks[4], (F_l, F_int), jnp.float32) * 0.2,
        "bx": jax.random.normal(ks[5], (F_int,), jnp.float32) * 0.1,
        "gx": 1.0 + 0.1 * jax.random.normal(ks[6], (F_int,), jnp.float32),
        "betax": 0.05 * jax.random.normal(ks[7], (F_int,), jnp.float32),
        # psi: Conv2d(F_int, 1, 1) + BN(1) + Sigmoid
        "wp": jax.random.normal(ks[8], (F_int, 1), jnp.float32) * 0.2,
        "bp": jax.random.normal(ks[9], (1,), jnp.float32) * 0.1,
        "gp": 1.0 + 0.1 * jax.random.normal(ks[10], (1,), jnp.float32),
        "betap": 0.05 * jax.random.normal(ks[11], (1,), jnp.float32),
        # BN running stats (eval mode).
        "mg": jnp.zeros((F_int,), jnp.float32), "vg": jnp.ones((F_int,), jnp.float32),
        "mx": jnp.zeros((F_int,), jnp.float32), "vx": jnp.ones((F_int,), jnp.float32),
        "mp": jnp.zeros((1,), jnp.float32), "vp": jnp.ones((1,), jnp.float32),
    }
    return params


@functools.partial(jax.jit, static_argnames=("force_tp",))
def attention_block_forward(params, g, x, force_tp=None):
    """g: (N, F_g, H, W), x: (N, F_l, H, W) NCHW -> (N, F_l, H, W).

    I/O dtype is whatever the caller provides (f32 or bf16); in-kernel math is
    always f32. The output dtype matches x.
    """
    N, F_g, H, W = g.shape
    _, F_l, _, _ = x.shape
    F_int = params["wg"].shape[1]

    wg_eff, bg_eff = _fold_conv_bn(params["wg"], params["bg"], params["gg"],
                                   params["betag"], params["mg"], params["vg"])
    wx_eff, bx_eff = _fold_conv_bn(params["wx"], params["bx"], params["gx"],
                                   params["betax"], params["mx"], params["vx"])
    wp_eff, bp_eff = _fold_conv_bn(params["wp"], params["bp"], params["gp"],
                                   params["betap"], params["mp"], params["vp"])

    # Kernel-side weight layouts: (F_int, C_in) for channels-on-sublane;
    # the two first-stage biases fused into one column.
    wgT = jnp.transpose(wg_eff)                         # (F_int, F_g)
    wxT = jnp.transpose(wx_eff)                         # (F_int, F_l)
    b_gx = (bg_eff + bx_eff).reshape(F_int, 1)
    wp_col = wp_eff.reshape(F_int, 1)
    bp = bp_eff.reshape(1, 1)                           # SMEM scalar

    # NCHW -> (N, C, H*W): contiguous reshape, no HBM copy, no transpose.
    P = H * W
    g3 = g.reshape(N, F_g, P)
    x3 = x.reshape(N, F_l, P)

    out3 = _attention_gate_nchw(g3, x3, wgT, wxT, b_gx, wp_col, bp,
                                force_tp=force_tp)
    return out3.reshape(N, F_l, H, W)


def _reference_forward(params, g, x):
    """Pure-JAX reference (eval-mode BN), NCHW f32, for correctness checking."""
    wg_eff, bg_eff = _fold_conv_bn(params["wg"], params["bg"], params["gg"],
                                   params["betag"], params["mg"], params["vg"])
    wx_eff, bx_eff = _fold_conv_bn(params["wx"], params["bx"], params["gx"],
                                   params["betax"], params["mx"], params["vx"])
    wp_eff, bp_eff = _fold_conv_bn(params["wp"], params["bp"], params["gp"],
                                   params["betap"], params["mp"], params["vp"])
    hp = jax.lax.Precision.HIGHEST
    g1 = jnp.einsum("nchw,cf->nfhw", g, wg_eff, precision=hp) + \
        bg_eff[None, :, None, None]
    x1 = jnp.einsum("nchw,cf->nfhw", x, wx_eff, precision=hp) + \
        bx_eff[None, :, None, None]
    p = jnp.maximum(g1 + x1, 0.0)
    logit = jnp.einsum("nfhw,fo->nohw", p, wp_eff, precision=hp) + \
        bp_eff[None, :, None, None]
    psi = jax.nn.sigmoid(logit)
    return x * psi


if __name__ == "__main__":
    key = jax.random.PRNGKey(0)
    kp, kg, kx, kp2, kg2, kx2 = jax.random.split(key, 6)

    # --- Test 1: tiny channels (VPU projection path), f32 I/O --------------
    F_g, F_l, F_int = 4, 4, 8
    N, H, W = 2, 16, 16
    params = make_attention_block_params(kp, F_g, F_l, F_int)
    g = jax.random.normal(kg, (N, F_g, H, W), jnp.float32)
    x = jax.random.normal(kx, (N, F_l, H, W), jnp.float32)

    out = jax.block_until_ready(attention_block_forward(params, g, x))
    ref = _reference_forward(params, g, x)
    assert out.shape == (N, F_l, H, W) and out.dtype == x.dtype
    assert jnp.allclose(out, ref, atol=1e-4, rtol=1e-4), "f32 mismatch vs reference"

    # --- Test 2: bf16 I/O (half the HBM traffic), f32 in-kernel math -------
    g16 = g.astype(jnp.bfloat16)
    x16 = x.astype(jnp.bfloat16)
    out16 = jax.block_until_ready(attention_block_forward(params, g16, x16))
    ref16 = _reference_forward(params, g16.astype(jnp.float32),
                               x16.astype(jnp.float32))
    assert out16.dtype == jnp.bfloat16
    assert jnp.allclose(out16.astype(jnp.float32), ref16, atol=3e-2, rtol=3e-2), \
        "bf16 mismatch vs reference"

    # --- Test 3: MXU path (channels > 16), odd P, forced small tile to
    #             exercise the ragged pl.cdiv pixel tiling ------------------
    F_g2, F_l2, F_int2 = 24, 24, 16
    N2, H2, W2 = 1, 18, 18
    params2 = make_attention_block_params(kp2, F_g2, F_l2, F_int2)
    g2 = jax.random.normal(kg2, (N2, F_g2, H2, W2), jnp.float32)
    x2 = jax.random.normal(kx2, (N2, F_l2, H2, W2), jnp.float32)
    out2 = jax.block_until_ready(
        attention_block_forward(params2, g2, x2, force_tp=128))
    ref2 = _reference_forward(params2, g2, x2)
    assert jnp.allclose(out2, ref2, atol=1e-4, rtol=1e-4), \
        "ragged-tile mismatch vs reference"

    # TODO(synk): training-mode BatchNorm (batch-statistics update) is not
    # implemented; eval-mode running stats are folded into the 1x1 convs.
    print("KERNEL_OK")
</pallas_src>

<mosaic_0001>
module attributes {stable_mosaic.version = 11 : i64} {
  func.func @_attention_gate_kernel(%arg0: i32, %arg1: i32, %arg2: memref<1x4x256xf32, #tpu.memory_space<vmem>>, %arg3: memref<1x4x256xf32, #tpu.memory_space<vmem>>, %arg4: memref<8x4xf32, #tpu.memory_space<vmem>>, %arg5: memref<8x4xf32, #tpu.memory_space<vmem>>, %arg6: memref<8x1xf32, #tpu.memory_space<vmem>>, %arg7: memref<8x1xf32, #tpu.memory_space<vmem>>, %arg8: memref<1x1xf32, #tpu.memory_space<smem>>, %arg9: memref<1x4x256xf32, #tpu.memory_space<vmem>>) attributes {dimension_semantics = [#tpu.dimension_semantics<parallel>, #tpu.dimension_semantics<parallel>], iteration_bounds = array<i64: 2, 1>, scalar_prefetch = 0 : i64, scratch_operands = 0 : i64, tpu.core_type = #tpu.core_type<tc>, window_params = [{transform_indices = @transform_0, window_bounds = array<i64: 1, 4, 256>}, {transform_indices = @transform_1, window_bounds = array<i64: 1, 4, 256>}, {pipeline_mode = #tpu.pipeline_mode<synchronous>, transform_indices = @transform_2, window_bounds = array<i64: 8, 4>}, {pipeline_mode = #tpu.pipeline_mode<synchronous>, transform_indices = @transform_3, window_bounds = array<i64: 8, 4>}, {pipeline_mode = #tpu.pipeline_mode<synchronous>, transform_indices = @transform_4, window_bounds = array<i64: 8, 1>}, {pipeline_mode = #tpu.pipeline_mode<synchronous>, transform_indices = @transform_5, window_bounds = array<i64: 8, 1>}, {transform_indices = @transform_6, window_bounds = array<i64: 1, 1>}, {transform_indices = @transform_7, window_bounds = array<i64: 1, 4, 256>}]} {
    %c0 = arith.constant 0 : index
    %c0_0 = arith.constant 0 : index
    %0 = vector.load %arg4[%c0, %c0_0] : memref<8x4xf32, #tpu.memory_space<vmem>>, vector<8x4xf32>
    %c0_1 = arith.constant 0 : index
    %c0_2 = arith.constant 0 : index
    %1 = vector.load %arg5[%c0_1, %c0_2] : memref<8x4xf32, #tpu.memory_space<vmem>>, vector<8x4xf32>
    %c0_3 = arith.constant 0 : index
    %c0_4 = arith.constant 0 : index
    %2 = vector.load %arg6[%c0_3, %c0_4] : memref<8x1xf32, #tpu.memory_space<vmem>>, vector<8x1xf32>
    %c0_5 = arith.constant 0 : index
    %c0_6 = arith.constant 0 : index
    %3 = vector.load %arg7[%c0_5, %c0_6] : memref<8x1xf32, #tpu.memory_space<vmem>>, vector<8x1xf32>
    %c0_7 = arith.constant 0 : index
    %c0_8 = arith.constant 0 : index
    %4 = memref.load %arg8[%c0_7, %c0_8] : memref<1x1xf32, #tpu.memory_space<smem>>
    %c0_9 = arith.constant 0 : index
    %c0_10 = arith.constant 0 : index
    %c0_11 = arith.constant 0 : index
    %5 = vector.load %arg2[%c0_9, %c0_10, %c0_11] : memref<1x4x256xf32, #tpu.memory_space<vmem>>, vector<1x4x256xf32>
    %6 = vector.shape_cast %5 : vector<1x4x256xf32> to vector<4x256xf32>
    %c0_12 = arith.constant 0 : index
    %c0_13 = arith.constant 0 : index
    %c0_14 = arith.constant 0 : index
    %7 = vector.load %arg3[%c0_12, %c0_13, %c0_14] : memref<1x4x256xf32, #tpu.memory_space<vmem>>, vector<1x4x256xf32>
    %8 = vector.shape_cast %7 : vector<1x4x256xf32> to vector<4x256xf32>
    %9 = vector.extract_strided_slice %0 {offsets = [0, 0], sizes = [8, 1], strides = [1, 1]} : vector<8x4xf32> to vector<8x1xf32>
    %10 = vector.extract_strided_slice %6 {offsets = [0, 0], sizes = [1, 256], strides = [1, 1]} : vector<4x256xf32> to vector<1x256xf32>
    %11 = vector.broadcast %9 : vector<8x1xf32> to vector<8x256xf32>
    %12 = vector.broadcast %10 : vector<1x256xf32> to vector<8x256xf32>
    %13 = arith.mulf %11, %12 : vector<8x256xf32>
    %14 = vector.extract_strided_slice %0 {offsets = [0, 1], sizes = [8, 1], strides = [1, 1]} : vector<8x4xf32> to vector<8x1xf32>
    %15 = vector.extract_strided_slice %6 {offsets = [1, 0], sizes = [1, 256], strides = [1, 1]} : vector<4x256xf32> to vector<1x256xf32>
    %16 = vector.broadcast %14 : vector<8x1xf32> to vector<8x256xf32>
    %17 = vector.broadcast %15 : vector<1x256xf32> to vector<8x256xf32>
    %18 = arith.mulf %16, %17 : vector<8x256xf32>
    %19 = arith.addf %13, %18 : vector<8x256xf32>
    %20 = vector.extract_strided_slice %0 {offsets = [0, 2], sizes = [8, 1], strides = [1, 1]} : vector<8x4xf32> to vector<8x1xf32>
    %21 = vector.extract_strided_slice %6 {offsets = [2, 0], sizes = [1, 256], strides = [1, 1]} : vector<4x256xf32> to vector<1x256xf32>
    %22 = vector.broadcast %20 : vector<8x1xf32> to vector<8x256xf32>
    %23 = vector.broadcast %21 : vector<1x256xf32> to vector<8x256xf32>
    %24 = arith.mulf %22, %23 : vector<8x256xf32>
    %25 = arith.addf %19, %24 : vector<8x256xf32>
    %26 = vector.extract_strided_slice %0 {offsets = [0, 3], sizes = [8, 1], strides = [1, 1]} : vector<8x4xf32> to vector<8x1xf32>
    %27 = vector.extract_strided_slice %6 {offsets = [3, 0], sizes = [1, 256], strides = [1, 1]} : vector<4x256xf32> to vector<1x256xf32>
    %28 = vector.broadcast %26 : vector<8x1xf32> to vector<8x256xf32>
    %29 = vector.broadcast %27 : vector<1x256xf32> to vector<8x256xf32>
    %30 = arith.mulf %28, %29 : vector<8x256xf32>
    %31 = arith.addf %25, %30 : vector<8x256xf32>
    %32 = vector.extract_strided_slice %1 {offsets = [0, 0], sizes = [8, 1], strides = [1, 1]} : vector<8x4xf32> to vector<8x1xf32>
    %33 = vector.extract_strided_slice %8 {offsets = [0, 0], sizes = [1, 256], strides = [1, 1]} : vector<4x256xf32> to vector<1x256xf32>
    %34 = vector.broadcast %32 : vector<8x1xf32> to vector<8x256xf32>
    %35 = vector.broadcast %33 : vector<1x256xf32> to vector<8x256xf32>
    %36 = arith.mulf %34, %35 : vector<8x256xf32>
    %37 = vector.extract_strided_slice %1 {offsets = [0, 1], sizes = [8, 1], strides = [1, 1]} : vector<8x4xf32> to vector<8x1xf32>
    %38 = vector.extract_strided_slice %8 {offsets = [1, 0], sizes = [1, 256], strides = [1, 1]} : vector<4x256xf32> to vector<1x256xf32>
    %39 = vector.broadcast %37 : vector<8x1xf32> to vector<8x256xf32>
    %40 = vector.broadcast %38 : vector<1x256xf32> to vector<8x256xf32>
    %41 = arith.mulf %39, %40 : vector<8x256xf32>
    %42 = arith.addf %36, %41 : vector<8x256xf32>
    %43 = vector.extract_strided_slice %1 {offsets = [0, 2], sizes = [8, 1], strides = [1, 1]} : vector<8x4xf32> to vector<8x1xf32>
    %44 = vector.extract_strided_slice %8 {offsets = [2, 0], sizes = [1, 256], strides = [1, 1]} : vector<4x256xf32> to vector<1x256xf32>
    %45 = vector.broadcast %43 : vector<8x1xf32> to vector<8x256xf32>
    %46 = vector.broadcast %44 : vector<1x256xf32> to vector<8x256xf32>
    %47 = arith.mulf %45, %46 : vector<8x256xf32>
    %48 = arith.addf %42, %47 : vector<8x256xf32>
    %49 = vector.extract_strided_slice %1 {offsets = [0, 3], sizes = [8, 1], strides = [1, 1]} : vector<8x4xf32> to vector<8x1xf32>
    %50 = vector.extract_strided_slice %8 {offsets = [3, 0], sizes = [1, 256], strides = [1, 1]} : vector<4x256xf32> to vector<1x256xf32>
    %51 = vector.broadcast %49 : vector<8x1xf32> to vector<8x256xf32>
    %52 = vector.broadcast %50 : vector<1x256xf32> to vector<8x256xf32>
    %53 = arith.mulf %51, %52 : vector<8x256xf32>
    %54 = arith.addf %48, %53 : vector<8x256xf32>
    %55 = arith.addf %31, %54 : vector<8x256xf32>
    %56 = vector.broadcast %2 : vector<8x1xf32> to vector<8x256xf32>
    %57 = arith.addf %55, %56 : vector<8x256xf32>
    %cst = arith.constant 0.000000e+00 : f32
    %58 = vector.broadcast %cst : f32 to vector<8x256xf32>
    %59 = arith.maximumf %57, %58 : vector<8x256xf32>
    %60 = vector.broadcast %3 : vector<8x1xf32> to vector<8x256xf32>
    %61 = arith.mulf %59, %60 : vector<8x256xf32>
    %cst_15 = arith.constant dense<0.000000e+00> : vector<256xf32>
    %62 = vector.multi_reduction <add>, %61, %cst_15 [0] : vector<8x256xf32> to vector<256xf32>
    %63 = vector.shape_cast %62 : vector<256xf32> to vector<1x256xf32>
    %64 = vector.broadcast %4 : f32 to vector<1x256xf32>
    %65 = arith.addf %63, %64 : vector<1x256xf32>
    %66 = arith.negf %65 : vector<1x256xf32>
    %67 = math.exp %66 : vector<1x256xf32>
    %cst_16 = arith.constant 1.000000e+00 : f32
    %68 = vector.broadcast %cst_16 : f32 to vector<1x256xf32>
    %69 = arith.addf %68, %67 : vector<1x256xf32>
    %70 = arith.divf %68, %69 : vector<1x256xf32>
    %71 = vector.broadcast %70 : vector<1x256xf32> to vector<4x256xf32>
    %72 = arith.mulf %8, %71 : vector<4x256xf32>
    %c0_17 = arith.constant 0 : index
    %c0_18 = arith.constant 0 : index
    %c0_19 = arith.constant 0 : index
    %73 = vector.load %arg9[%c0_17, %c0_18, %c0_19] : memref<1x4x256xf32, #tpu.memory_space<vmem>>, vector<1x4x256xf32>
    %74 = vector.shape_cast %73 : vector<1x4x256xf32> to vector<4x256xf32>
    %75 = vector.shape_cast %72 : vector<4x256xf32> to vector<1x4x256xf32>
    tpu.vector_store %arg9[%c0_17, %c0_18, %c0_19], %75 {strides = array<i32>} : memref<1x4x256xf32, #tpu.memory_space<vmem>>, vector<1x4x256xf32>,
    return
  }
  func.func @transform_0(%arg0: i32, %arg1: i32) -> (i32, i32, i32) {
    %c0_i32 = arith.constant 0 : i32
    %c0_i32_0 = arith.constant 0 : i32
    return %arg0, %c0_i32, %arg1 : i32, i32, i32
  }
  func.func @transform_1(%arg0: i32, %arg1: i32) -> (i32, i32, i32) {
    %c0_i32 = arith.constant 0 : i32
    %c0_i32_0 = arith.constant 0 : i32
    return %arg0, %c0_i32, %arg1 : i32, i32, i32
  }
  func.func @transform_2(%arg0: i32, %arg1: i32) -> (i32, i32) {
    %c0_i32 = arith.constant 0 : i32
    %c0_i32_0 = arith.constant 0 : i32
    %c0_i32_1 = arith.constant 0 : i32
    return %c0_i32, %c0_i32_0 : i32, i32
  }
  func.func @transform_3(%arg0: i32, %arg1: i32) -> (i32, i32) {
    %c0_i32 = arith.constant 0 : i32
    %c0_i32_0 = arith.constant 0 : i32
    %c0_i32_1 = arith.constant 0 : i32
    return %c0_i32, %c0_i32_0 : i32, i32
  }
  func.func @transform_4(%arg0: i32, %arg1: i32) -> (i32, i32) {
    %c0_i32 = arith.constant 0 : i32
    %c0_i32_0 = arith.constant 0 : i32
    %c0_i32_1 = arith.constant 0 : i32
    return %c0_i32, %c0_i32_0 : i32, i32
  }
  func.func @transform_5(%arg0: i32, %arg1: i32) -> (i32, i32) {
    %c0_i32 = arith.constant 0 : i32
    %c0_i32_0 = arith.constant 0 : i32
    %c0_i32_1 = arith.constant 0 : i32
    return %c0_i32, %c0_i32_0 : i32, i32
  }
  func.func @transform_6(%arg0: i32, %arg1: i32) -> (i32, i32) {
    %c0_i32 = arith.constant 0 : i32
    %c0_i32_0 = arith.constant 0 : i32
    %c0_i32_1 = arith.constant 0 : i32
    return %c0_i32, %c0_i32_0 : i32, i32
  }
  func.func @transform_7(%arg0: i32, %arg1: i32) -> (i32, i32, i32) {
    %c0_i32 = arith.constant 0 : i32
    %c0_i32_0 = arith.constant 0 : i32
    return %arg0, %c0_i32, %arg1 : i32, i32, i32
  }
}

</mosaic_0001>

<llo_original>
// kernel: attention_block_forward.1
$region0: #{attention_block_forward.1}
  #allocation0 [shape = 'u32[]', space=smem, size = 0x4, offset = 0x4, fixed_abs, tag = 'smem constant byte address 0x4 - core index']
  #allocation1 [shape = 'u32[72,128]{1,0:T(1,128)}', space=vmem, size = 0x9000, scoped, tag = 'internal scratch']
  #allocation2 [shape = 'f32[1,1]{1,0:T(1,128)S(6)}', space=smem, size = 0x200, scoped, tag = 'scoped memory for attention_block_forward.1']
  %s0 = inlined_call_operand.vmem [shape: f32[2,4,256], index: 0, kind: input, shape index: {}]
  %s1 = inlined_call_operand.vmem [shape: f32[2,4,256], index: 1, kind: input, shape index: {}]
  %s2 = inlined_call_operand.vmem [shape: f32[8,4], index: 2, kind: input, shape index: {}]
  %s3 = inlined_call_operand.vmem [shape: f32[8,4], index: 3, kind: input, shape index: {}]
  %s4 = inlined_call_operand.vmem [shape: f32[8,1], index: 4, kind: input, shape index: {}]
  %s5 = inlined_call_operand.vmem [shape: f32[8,1], index: 5, kind: input, shape index: {}]
  %s6 = inlined_call_operand.<no memory space> [shape: f32[1,1], index: 6, kind: input, shape index: {}]
  %s7 = inlined_call_operand.vmem [shape: f32[2,4,256], index: 7, kind: output, shape index: {}]
  %s8 = sld [smem:[#allocation0]]
  $region61: #{attention_block_forward.1} parent=0
    _
  %s10 = ssub.s32 1, %s8
  %s11 = scalar_select 0, %s10, %s8
  %12 = sst [smem:[#allocation2]] %s6
  loop: start=0, step=1, limit=4
  $region2: #{attention_block_forward.1} parent=0 // loop_pre_header
    _
  $region3: #{attention_block_forward.1} parent=0 // loop_header
    %s14 = sphi 0, %s18
    %p15 = scmp.ge.s32.totalorder %s14, 4
    %s21 = sphi 0, %s33
    %s22 = sphi 0, %s29
    %s23 = sphi 0, %s21
    %s24 = sphi 0, %s22
    %s25 = sphi 0, %s23
    %s26 = sphi 0, %s24
    %s38 = sphi 0, %s40
    %s41 = sphi 0, %s38
    %s42 = sphi 0, %s41
    %s58 = sphi 0, %s42
    %s66 = sphi 0, %s68
    %s69 = sphi 0, %s66
    %s70 = sphi 0, %s69
    %s86 = sphi 0, %s70
    %s90 = sphi 0, %s90
    %s92 = sphi 0, %s90
    %s93 = sphi 0, %s92
    %s107 = sphi 0, %s93
    %s111 = sphi 0, %s111
    %s113 = sphi 0, %s111
    %s114 = sphi 0, %s113
    %s128 = sphi 0, %s114
    %s132 = sphi 0, %s132
    %s134 = sphi 0, %s132
    %s135 = sphi 0, %s134
    %s149 = sphi 0, %s135
    %s153 = sphi 0, %s153
    %s155 = sphi 0, %s153
    %s156 = sphi 0, %s155
    %s170 = sphi 0, %s156
    %s174 = sphi 0, %s174
    %s176 = sphi 0, %s174
    %s177 = sphi 0, %s176
    %s191 = sphi 0, %s177
    %s199 = sphi 0, %s201
    %s202 = sphi 0, %s199
    %s203 = sphi 0, %s202
    %s219 = sphi 0, %s203
  $region4: #{attention_block_forward.1} parent=0 // loop_header_branch
    %17 = sbr.rel (%p15) target = $region8
  $region5: #{attention_block_forward.1} parent=0 // loop_body
    %s19 = ssub.s32 %s14, 1
    %s20 = ssub.s32 %s14, 2
    %s27 = sadd.s32 1, %s22
    %p28 = scmp.ge.s32.totalorder %s27, 1
    %s29 = scalar_select %p28, 0, %s27
    %s30 = sadd.s32 1, %s21
    %s31 = scalar_select %p28, %s30, %s21
    %p32 = scmp.ge.s32.totalorder %s31, 2
    %s33 = scalar_select %p32, 0, %s31
    %s34 = ssub.s32 %s21, %s33
    %s35 = ssub.s32 %s22, %s29
    %s36 = sor.u32 %s34, %s35
    %p37 = scmp.eq.s32.totalorder %s36, 0
    %s39 = sadd.s32 %s38, 1
    %s40 = scalar_select %p37, %s38, %s39
    %p43 = pneg %p37
    %p44 = scmp.eq.s32.totalorder %s14, 1
    %p45 = por %p43, %p44
    %p46 = scmp.ne.s32.totalorder %s38, %s41
    %p47 = scmp.eq.s32.totalorder %s14, 0
    %p48 = por %p46, %p47
    %p49 = scmp.ne.s32.totalorder %s38, %s41
    %p50 = scmp.eq.s32.totalorder %s19, 1
    %p51 = por %p49, %p50
    %p52 = scmp.ne.s32.totalorder %s41, %s42
    %p53 = scmp.eq.s32.totalorder %s19, 0
    %p54 = por %p52, %p53
    %p55 = scmp.ne.s32.totalorder %s41, %s42
    %p56 = scmp.eq.s32.totalorder %s20, 1
    %p57 = por %p55, %p56
    %p59 = scmp.ne.s32.totalorder %s42, %s58
    %p60 = scmp.eq.s32.totalorder %s20, 0
    %p61 = por %p59, %p60
    %s62 = ssub.s32 %s21, %s33
    %s63 = ssub.s32 %s22, %s29
    %s64 = sor.u32 %s62, %s63
    %p65 = scmp.eq.s32.totalorder %s64, 0
    %s67 = sadd.s32 %s66, 1
    %s68 = scalar_select %p65, %s66, %s67
    %p71 = pneg %p65
    %p72 = scmp.eq.s32.totalorder %s14, 1
    %p73 = por %p71, %p72
    %p74 = scmp.ne.s32.totalorder %s66, %s69
    %p75 = scmp.eq.s32.totalorder %s14, 0
    %p76 = por %p74, %p75
    %p77 = scmp.ne.s32.totalorder %s66, %s69
    %p78 = scmp.eq.s32.totalorder %s19, 1
    %p79 = por %p77, %p78
    %p80 = scmp.ne.s32.totalorder %s69, %s70
    %p81 = scmp.eq.s32.totalorder %s19, 0
    %p82 = por %p80, %p81
    %p83 = scmp.ne.s32.totalorder %s69, %s70
    %p84 = scmp.eq.s32.totalorder %s20, 1
    %p85 = por %p83, %p84
    %p87 = scmp.ne.s32.totalorder %s70, %s86
    %p88 = scmp.eq.s32.totalorder %s20, 0
    %p89 = por %p87, %p88
    %s91 = sadd.s32 %s90, 1
    %p94 = scmp.eq.s32.totalorder %s14, 1
    %p95 = scmp.ne.s32.totalorder %s90, %s92
    %p96 = scmp.eq.s32.totalorder %s14, 0
    %p97 = por %p95, %p96
    %p98 = scmp.ne.s32.totalorder %s90, %s92
    %p99 = scmp.eq.s32.totalorder %s19, 1
    %p100 = por %p98, %p99
    %p101 = scmp.ne.s32.totalorder %s92, %s93
    %p102 = scmp.eq.s32.totalorder %s19, 0
    %p103 = por %p101, %p102
    %p104 = scmp.ne.s32.totalorder %s92, %s93
    %p105 = scmp.eq.s32.totalorder %s20, 1
    %p106 = por %p104, %p105
    %p108 = scmp.ne.s32.totalorder %s93, %s107
    %p109 = scmp.eq.s32.totalorder %s20, 0
    %p110 = por %p108, %p109
    %s112 = sadd.s32 %s111, 1
    %p115 = scmp.eq.s32.totalorder %s14, 1
    %p116 = scmp.ne.s32.totalorder %s111, %s113
    %p117 = scmp.eq.s32.totalorder %s14, 0
    %p118 = por %p116, %p117
    %p119 = scmp.ne.s32.totalorder %s111, %s113
    %p120 = scmp.eq.s32.totalorder %s19, 1
    %p121 = por %p119, %p120
    %p122 = scmp.ne.s32.totalorder %s113, %s114
    %p123 = scmp.eq.s32.totalorder %s19, 0
    %p124 = por %p122, %p123
    %p125 = scmp.ne.s32.totalorder %s113, %s114
    %p126 = scmp.eq.s32.totalorder %s20, 1
    %p127 = por %p125, %p126
    %p129 = scmp.ne.s32.totalorder %s114, %s128
    %p130 = scmp.eq.s32.totalorder %s20, 0
    %p131 = por %p129, %p130
    %s133 = sadd.s32 %s132, 1
    %p136 = scmp.eq.s32.totalorder %s14, 1
    %p137 = scmp.ne.s32.totalorder %s132, %s134
    %p138 = scmp.eq.s32.totalorder %s14, 0
    %p139 = por %p137, %p138
    %p140 = scmp.ne.s32.totalorder %s132, %s134
    %p141 = scmp.eq.s32.totalorder %s19, 1
    %p142 = por %p140, %p141
    %p143 = scmp.ne.s32.totalorder %s134, %s135
    %p144 = scmp.eq.s32.totalorder %s19, 0
    %p145 = por %p143, %p144
    %p146 = scmp.ne.s32.totalorder %s134, %s135
    %p147 = scmp.eq.s32.totalorder %s20, 1
    %p148 = por %p146, %p147
    %p150 = scmp.ne.s32.totalorder %s135, %s149
    %p151 = scmp.eq.s32.totalorder %s20, 0
    %p152 = por %p150, %p151
    %s154 = sadd.s32 %s153, 1
    %p157 = scmp.eq.s32.totalorder %s14, 1
    %p158 = scmp.ne.s32.totalorder %s153, %s155
    %p159 = scmp.eq.s32.totalorder %s14, 0
    %p160 = por %p158, %p159
    %p161 = scmp.ne.s32.totalorder %s153, %s155
    %p162 = scmp.eq.s32.totalorder %s19, 1
    %p163 = por %p161, %p162
    %p164 = scmp.ne.s32.totalorder %s155, %s156
    %p165 = scmp.eq.s32.totalorder %s19, 0
    %p166 = por %p164, %p165
    %p167 = scmp.ne.s32.totalorder %s155, %s156
    %p168 = scmp.eq.s32.totalorder %s20, 1
    %p169 = por %p167, %p168
    %p171 = scmp.ne.s32.totalorder %s156, %s170
    %p172 = scmp.eq.s32.totalorder %s20, 0
    %p173 = por %p171, %p172
    %s175 = sadd.s32 %s174, 1
    %p178 = scmp.eq.s32.totalorder %s14, 1
    %p179 = scmp.ne.s32.totalorder %s174, %s176
    %p180 = scmp.eq.s32.totalorder %s14, 0
    %p181 = por %p179, %p180
    %p182 = scmp.ne.s32.totalorder %s174, %s176
    %p183 = scmp.eq.s32.totalorder %s19, 1
    %p184 = por %p182, %p183
    %p185 = scmp.ne.s32.totalorder %s176, %s177
    %p186 = scmp.eq.s32.totalorder %s19, 0
    %p187 = por %p185, %p186
    %p188 = scmp.ne.s32.totalorder %s176, %s177
    %p189 = scmp.eq.s32.totalorder %s20, 1
    %p190 = por %p188, %p189
    %p192 = scmp.ne.s32.totalorder %s177, %s191
    %p193 = scmp.eq.s32.totalorder %s20, 0
    %p194 = por %p192, %p193
    %s195 = ssub.s32 %s21, %s33
    %s196 = ssub.s32 %s22, %s29
    %s197 = sor.u32 %s195, %s196
    %p198 = scmp.eq.s32.totalorder %s197, 0
    %s200 = sadd.s32 %s199, 1
    %s201 = scalar_select %p198, %s199, %s200
    %p204 = pneg %p198
    %p205 = scmp.eq.s32.totalorder %s14, 1
    %p206 = por %p204, %p205
    %p207 = scmp.ne.s32.totalorder %s199, %s202
    %p208 = scmp.eq.s32.totalorder %s14, 0
    %p209 = por %p207, %p208
    %p210 = scmp.ne.s32.totalorder %s199, %s202
    %p211 = scmp.eq.s32.totalorder %s19, 1
    %p212 = por %p210, %p211
    %p213 = scmp.ne.s32.totalorder %s202, %s203
    %p214 = scmp.eq.s32.totalorder %s19, 0
    %p215 = por %p213, %p214
    %p216 = scmp.ne.s32.totalorder %s202, %s203
    %p217 = scmp.eq.s32.totalorder %s20, 1
    %p218 = por %p216, %p217
    %p220 = scmp.ne.s32.totalorder %s203, %s219
    %p221 = scmp.eq.s32.totalorder %s20, 0
    %p222 = por %p220, %p221
    %p223 = scmp.le.s32.totalorder 1, %s14
    %p224 = scmp.lt.s32.totalorder %s14, 3
    %p225 = pnand %p223, %p224
    %p226 = pneg %p225
    // Predicated region
    $region9: #{attention_block_forward.1} parent=5 // pred_check
      _
    $region10: #{attention_block_forward.1} parent=5 // pred_check_branch
      %228 = sbr.rel (%p225) target = $region12
    $region11: #{attention_block_forward.1} parent=5 // pred_region
      %s229 = ssub.s32 %s14, 1
      // Predicated region
      $region13: #{attention_block_forward.1} parent=11 // pred_check
        %p230 = pneg %p103
      $region14: #{attention_block_forward.1} parent=11 // pred_check_branch
        %232 = sbr.rel (%p230) target = $region16
      $region15: #{attention_block_forward.1} parent=11 // pred_region
        _
      $region16: #{attention_block_forward.1} parent=11 // pred_fallthru
        _
      // Predicated region
      $region17: #{attention_block_forward.1} parent=11 // pred_check
        %p233 = pneg %p124
      $region18: #{attention_block_forward.1} parent=11 // pred_check_branch
        %235 = sbr.rel (%p233) target = $region20
      $region19: #{attention_block_forward.1} parent=11 // pred_region
        _
      $region20: #{attention_block_forward.1} parent=11 // pred_fallthru
        _
      // Predicated region
      $region21: #{attention_block_forward.1} parent=11 // pred_check
        %p236 = pneg %p145
      $region22: #{attention_block_forward.1} parent=11 // pred_check_branch
        %238 = sbr.rel (%p236) target = $region24
      $region23: #{attention_block_forward.1} parent=11 // pred_region
        _
      $region24: #{attention_block_forward.1} parent=11 // pred_fallthru
        _
      // Predicated region
      $region25: #{attention_block_forward.1} parent=11 // pred_check
        %p239 = pneg %p166
      $region26: #{attention_block_forward.1} parent=11 // pred_check_branch
        %241 = sbr.rel (%p239) target = $region28
      $region27: #{attention_block_forward.1} parent=11 // pred_region
        _
      $region28: #{attention_block_forward.1} parent=11 // pred_fallthru
        _
      // Predicated region
      $region29: #{attention_block_forward.1} parent=11 // pred_check
        %p242 = pneg %p187
      $region30: #{attention_block_forward.1} parent=11 // pred_check_branch
        %244 = sbr.rel (%p242) target = $region32
      $region31: #{attention_block_forward.1} parent=11 // pred_region
        _
      $region32: #{attention_block_forward.1} parent=11 // pred_fallthru
        _
    $region12: #{attention_block_forward.1} parent=5 // pred_fallthru
      _
    %p245 = scmp.lt.s32.totalorder %s14, 2
    // Predicated region
    $region33: #{attention_block_forward.1} parent=5 // pred_check
      %p246 = pneg %p245
    $region34: #{attention_block_forward.1} parent=5 // pred_check_branch
      %248 = sbr.rel (%p246) target = $region36
    $region35: #{attention_block_forward.1} parent=5 // pred_region
      // Predicated region
      $region37: #{attention_block_forward.1} parent=35 // pred_check
        %p249 = pneg %p48
      $region38: #{attention_block_forward.1} parent=35 // pred_check_branch
        %251 = sbr.rel (%p249) target = $region40
      $region39: #{attention_block_forward.1} parent=35 // pred_region
        %s252 = smul.u32 2, %s22
        %p253 = scmp.lt.s32.totalorder %s21, 1
        %s254 = scalar_select %p253, %s21, 1
        %p255 = scmp.lt.s32.totalorder %s252, 1
        %s256 = scalar_select %p255, %s252, 1
        %s257 = smul.addr %s254, 2
        %s258 = sadd.s32 %s256, %s257
        %s259 = smul.addr %s258, 4
        %s260 = scalar_lea.vmem %s0, %s259
        %s261 = smul.u32 2, %s22
      $region40: #{attention_block_forward.1} parent=35 // pred_fallthru
        _
      // Predicated region
      $region41: #{attention_block_forward.1} parent=35 // pred_check
        %p262 = pneg %p76
      $region42: #{attention_block_forward.1} parent=35 // pred_check_branch
        %264 = sbr.rel (%p262) target = $region44
      $region43: #{attention_block_forward.1} parent=35 // pred_region
        %s265 = smul.u32 2, %s22
        %p266 = scmp.lt.s32.totalorder %s21, 1
        %s267 = scalar_select %p266, %s21, 1
        %p268 = scmp.lt.s32.totalorder %s265, 1
        %s269 = scalar_select %p268, %s265, 1
        %s270 = smul.addr %s267, 2
        %s271 = sadd.s32 %s269, %s270
        %s272 = smul.addr %s271, 4
        %s273 = scalar_lea.vmem %s1, %s272
        %s274 = smul.u32 2, %s22
      $region44: #{attention_block_forward.1} parent=35 // pred_fallthru
        _
    $region36: #{attention_block_forward.1} parent=5 // pred_fallthru
      _
    %p275 = scmp.le.s32.totalorder 1, %s14
    %p276 = scmp.lt.s32.totalorder %s14, 3
    %p277 = pnand %p275, %p276
    %p278 = pneg %p277
    // Predicated region
    $region45: #{attention_block_forward.1} parent=5 // pred_check
      _
    $region46: #{attention_block_forward.1} parent=5 // pred_check_branch
      %280 = sbr.rel (%p277) target = $region48
    $region47: #{attention_block_forward.1} parent=5 // pred_region
      %s281 = ssub.s32 %s14, 1
      %s282 = smul.u32 2, %s24
      %p283 = scmp.lt.s32.totalorder %s23, 1
      %s284 = scalar_select %p283, %s23, 1
      %p285 = scmp.lt.s32.totalorder %s282, 1
      %s286 = scalar_select %p285, %s282, 1
      %s287 = smul.addr %s284, 2
      %s288 = sadd.s32 %s286, %s287
      %s289 = smul.addr %s288, 4
      %s290 = scalar_lea.vmem %s0, %s289
      %p291 = pneg %p54
      %p292 = pneg %p51
      %s293 = smul.u32 2, %s24
      %p294 = scmp.lt.s32.totalorder %s23, 1
      %s295 = scalar_select %p294, %s23, 1
      %p296 = scmp.lt.s32.totalorder %s293, 1
      %s297 = scalar_select %p296, %s293, 1
      %s298 = smul.addr %s295, 2
      %s299 = sadd.s32 %s297, %s298
      %s300 = smul.addr %s299, 4
      %s301 = scalar_lea.vmem %s1, %s300
      %p302 = pneg %p82
      %p303 = pneg %p79
      %p304 = pneg %p103
      %p305 = pneg %p100
      %p306 = pneg %p124
      %p307 = pneg %p121
      %p308 = pneg %p145
      %p309 = pneg %p142
      %p310 = pneg %p166
      %p311 = pneg %p163
      %p312 = pneg %p187
      %p313 = pneg %p184
      %p314 = pneg %p215
      %p315 = pneg %p212
      %s316 = smul.u32 2, %s24
      %p317 = scmp.lt.s32.totalorder %s23, 1
      %s318 = scalar_select %p317, %s23, 1
      %p319 = scmp.lt.s32.totalorder %s316, 1
      %s320 = scalar_select %p319, %s316, 1
      %s321 = smul.addr %s318, 2
      %s322 = sadd.s32 %s320, %s321
      %s323 = smul.addr %s322, 4
      %s324 = scalar_lea.vmem %s7, %s323
      %s325 = smul.u32 2, %s24
      %p326 = scmp.lt.s32.totalorder %s23, 1
      %s327 = scalar_select %p326, %s23, 1
      %p328 = scmp.lt.s32.totalorder %s325, 1
      %s329 = scalar_select %p328, %s325, 1
      %s330 = smul.addr %s327, 2
      %s331 = sadd.s32 %s329, %s330
      %s332 = smul.addr %s331, 4
      %s333 = scalar_lea.vmem %s0, %s332
      %s334 = smul.u32 2, %s24
      %s335 = smul.u32 2, %s24
      %p336 = scmp.lt.s32.totalorder %s23, 1
      %s337 = scalar_select %p336, %s23, 1
      %p338 = scmp.lt.s32.totalorder %s335, 1
      %s339 = scalar_select %p338, %s335, 1
      %s340 = smul.addr %s337, 2
      %s341 = sadd.s32 %s339, %s340
      %s342 = smul.addr %s341, 4
      %s343 = scalar_lea.vmem %s1, %s342
      %s344 = smul.u32 2, %s24
      %s345 = smul.u32 2, %s24
      %p346 = scmp.lt.s32.totalorder %s23, 1
      %s347 = scalar_select %p346, %s23, 1
      %p348 = scmp.lt.s32.totalorder %s345, 1
      %s349 = scalar_select %p348, %s345, 1
      %s350 = smul.addr %s347, 2
      %s351 = sadd.s32 %s349, %s350
      %s352 = smul.addr %s351, 4
      %s353 = scalar_lea.vmem %s7, %s352
      %s354 = smul.u32 2, %s24
      %v355 = vld [vmem:[%s2] sm:$0xff]
      %v356 = vld [vmem:[%s3] sm:$0xff]
      %v357 = vld [vmem:[%s4] sm:$0xff]
      %v358 = vld [vmem:[%s5] sm:$0xff]
      %s359 = sld [smem:[#allocation2]]
      %v360 = vld [vmem:[%s333] sm:$0xff]
      %v361 = vld [vmem:[%s343] sm:$0xff]
      %363 = vset.pattern.permute.xlu0 0
      %364 = vperm.xlu0 %363, %v355
      %v365 = vpop.permute.xlu0 %364
      %v368 = vperm.slane %v360, 0
      %v369 = vperm.slane %v360, 4
      %v372 = vperm.slane %v368, 0
      %v373 = vperm.slane %v369, 0
      %v374 = vmul.f32 %v365, %v372
      %v375 = vmul.f32 %v365, %v373
      %376 = vset.pattern.permute.xlu0 1
      %377 = vperm.xlu0 %376, %v355
      %v378 = vpop.permute.xlu0 %377
      %v380 = vperm.slane %v360, 1
      %v381 = vperm.slane %v360, 5
      %v384 = vperm.slane %v380, 1
      %v385 = vperm.slane %v381, 1
      %v386 = vmul.f32 %v378, %v384
      %v387 = vmul.f32 %v378, %v385
      %v388 = vadd.f32 %v374, %v386
      %v389 = vadd.f32 %v375, %v387
      %390 = vset.pattern.permute.xlu0 2
      %391 = vperm.xlu0 %390, %v355
      %v392 = vpop.permute.xlu0 %391
      %v394 = vperm.slane %v360, 2
      %v395 = vperm.slane %v360, 6
      %v398 = vperm.slane %v394, 2
      %v399 = vperm.slane %v395, 2
      %v400 = vmul.f32 %v392, %v398
      %v401 = vmul.f32 %v392, %v399
      %v402 = vadd.f32 %v388, %v400
      %v403 = vadd.f32 %v389, %v401
      %404 = vset.pattern.permute.xlu0 3
      %405 = vperm.xlu0 %404, %v355
      %v406 = vpop.permute.xlu0 %405
      %v408 = vperm.slane %v360, 3
      %v409 = vperm.slane %v360, 7
      %v412 = vperm.slane %v408, 3
      %v413 = vperm.slane %v409, 3
      %v414 = vmul.f32 %v406, %v412
      %v415 = vmul.f32 %v406, %v413
      %v416 = vadd.f32 %v402, %v414
      %v417 = vadd.f32 %v403, %v415
      %419 = vset.pattern.permute.xlu0 0
      %420 = vperm.xlu0 %419, %v356
      %v421 = vpop.permute.xlu0 %420
      %v424 = vperm.slane %v361, 0
      %v425 = vperm.slane %v361, 4
      %v428 = vperm.slane %v424, 0
      %v429 = vperm.slane %v425, 0
      %v430 = vmul.f32 %v421, %v428
      %v431 = vmul.f32 %v421, %v429
      %432 = vset.pattern.permute.xlu0 1
      %433 = vperm.xlu0 %432, %v356
      %v434 = vpop.permute.xlu0 %433
      %v436 = vperm.slane %v361, 1
      %v437 = vperm.slane %v361, 5
      %v440 = vperm.slane %v436, 1
      %v441 = vperm.slane %v437, 1
      %v442 = vmul.f32 %v434, %v440
      %v443 = vmul.f32 %v434, %v441
      %v444 = vadd.f32 %v430, %v442
      %v445 = vadd.f32 %v431, %v443
      %446 = vset.pattern.permute.xlu0 2
      %447 = vperm.xlu0 %446, %v356
      %v448 = vpop.permute.xlu0 %447
      %v450 = vperm.slane %v361, 2
      %v451 = vperm.slane %v361, 6
      %v454 = vperm.slane %v450, 2
      %v455 = vperm.slane %v451, 2
      %v456 = vmul.f32 %v448, %v454
      %v457 = vmul.f32 %v448, %v455
      %v458 = vadd.f32 %v444, %v456
      %v459 = vadd.f32 %v445, %v457
      %460 = vset.pattern.permute.xlu0 3
      %461 = vperm.xlu0 %460, %v356
      %v462 = vpop.permute.xlu0 %461
      %v464 = vperm.slane %v361, 3
      %v465 = vperm.slane %v361, 7
      %v468 = vperm.slane %v464, 3
      %v469 = vperm.slane %v465, 3
      %v470 = vmul.f32 %v462, %v468
      %v471 = vmul.f32 %v462, %v469
      %v472 = vadd.f32 %v458, %v470
      %v473 = vadd.f32 %v459, %v471
      %v474 = vadd.f32 %v416, %v472
      %v475 = vadd.f32 %v417, %v473
      %477 = vset.pattern.permute.xlu0 0
      %478 = vperm.xlu0 %477, %v357
      %v479 = vpop.permute.xlu0 %478
      %v481 = vadd.f32 %v474, %v479
      %v482 = vadd.f32 %v475, %v479
      %v483 = vmax.f32 %v481, 0.0
      %v484 = vmax.f32 %v482, 0.0
      %486 = vset.pattern.permute.xlu0 0
      %487 = vperm.xlu0 %486, %v358
      %v488 = vpop.permute.xlu0 %487
      %v490 = vmul.f32 %v483, %v488
      %v491 = vmul.f32 %v484, %v488
      %v492 = vrot.slane %v490, 4
      %v493 = vadd.f32 %v490, %v492
      %v494 = vrot.slane %v493, 2
      %v495 = vadd.f32 %v493, %v494
      %v496 = vrot.slane %v495, 1
      %v497 = vadd.f32 %v495, %v496
      %v498 = vrot.slane %v491, 4
      %v499 = vadd.f32 %v491, %v498
      %v500 = vrot.slane %v499, 2
      %v501 = vadd.f32 %v499, %v500
      %v502 = vrot.slane %v501, 1
      %v503 = vadd.f32 %v501, %v502
      %v504 = vstv %s359
      %v505 = vadd.f32 %v497, %v504
      %v506 = vadd.f32 %v503, %v504
      %v507 = vxor.u32 %v505, 2147483648
      %v508 = vxor.u32 %v506, 2147483648
      %v509 = vmul.f32 %v507, 1.442695
      %v510 = vpow.pop %v509
      %v511 = vmul.f32 %v508, 1.442695
      %v512 = vpow.pop %v511
      %v513 = vadd.f32 %v510, 1.0
      %v514 = vadd.f32 %v512, 1.0
      %v515 = vrcp.pop %v513
      %v516 = vmul.f32 %v513, %v515
      %v517 = vsub.f32 1.0, %v516
      %v518 = vmul.f32 %v515, %v517
      %v519 = vadd.f32 %v515, %v518
      %vm520 = vweird.f32 %v513
      %vm521 = vweird.f32 %v515
      %vm522 = vmor %vm520, %vm521
      %v523 = vsel %vm522, %v515, %v519
      %v524 = vand.u32 2147483647, %v513
      %vm525 = vcmp.eq.f32.partialorder %v524, 8.507059e+37
      %v526 = vand.u32 %v513, 2147483648
      %v527 = vor.u32 1.1754944e-38, %v526
      %v528 = vsel %vm525, %v527, %v523
      %v529 = vmul.f32 1.0, %v528
      %v530 = vrcp.pop %v514
      %v531 = vmul.f32 %v514, %v530
      %v532 = vsub.f32 1.0, %v531
      %v533 = vmul.f32 %v530, %v532
      %v534 = vadd.f32 %v530, %v533
      %vm535 = vweird.f32 %v514
      %vm536 = vweird.f32 %v530
      %vm537 = vmor %vm535, %vm536
      %v538 = vsel %vm537, %v530, %v534
      %v539 = vand.u32 2147483647, %v514
      %vm540 = vcmp.eq.f32.partialorder %v539, 8.507059e+37
      %v541 = vand.u32 %v514, 2147483648
      %v542 = vor.u32 1.1754944e-38, %v541
      %v543 = vsel %vm540, %v542, %v538
      %v544 = vmul.f32 1.0, %v543
      %v547 = vrot.slane %v544, 4
      %vm548 = vcmask 1043456
      %v549 = vsel %vm548, %v529, %v547
      %v551 = vmul.f32 %v361, %v549
      %552 = vst [vmem:[%s353] sm:$0xff] %v551
      %s553 = smul.u32 2, %s24
      %p554 = scmp.lt.s32.totalorder %s23, 1
      %s555 = scalar_select %p554, %s23, 1
      %p556 = scmp.lt.s32.totalorder %s553, 1
      %s557 = scalar_select %p556, %s553, 1
      %s558 = smul.addr %s555, 2
      %s559 = sadd.s32 %s557, %s558
      %s560 = smul.addr %s559, 4
      %s561 = scalar_lea.vmem %s7, %s560
      // Predicated region
      $region49: #{attention_block_forward.1} parent=47 // pred_check
        %p562 = pneg %p212
      $region50: #{attention_block_forward.1} parent=47 // pred_check_branch
        %564 = sbr.rel (%p562) target = $region52
      $region51: #{attention_block_forward.1} parent=47 // pred_region
        %s565 = smul.u32 2, %s24
      $region52: #{attention_block_forward.1} parent=47 // pred_fallthru
        _
    $region48: #{attention_block_forward.1} parent=5 // pred_fallthru
      _
    %p566 = scmp.le.s32.totalorder 2, %s14
    // Predicated region
    $region53: #{attention_block_forward.1} parent=5 // pred_check
      %p567 = pneg %p566
    $region54: #{attention_block_forward.1} parent=5 // pred_check_branch
      %569 = sbr.rel (%p567) target = $region56
    $region55: #{attention_block_forward.1} parent=5 // pred_region
      %s570 = ssub.s32 %s14, 2
      // Predicated region
      $region57: #{attention_block_forward.1} parent=55 // pred_check
        %p571 = pneg %p218
      $region58: #{attention_block_forward.1} parent=55 // pred_check_branch
        %573 = sbr.rel (%p571) target = $region60
      $region59: #{attention_block_forward.1} parent=55 // pred_region
        %s574 = smul.u32 2, %s26
        %p575 = scmp.lt.s32.totalorder %s25, 1
        %s576 = scalar_select %p575, %s25, 1
        %p577 = scmp.lt.s32.totalorder %s574, 1
        %s578 = scalar_select %p577, %s574, 1
        %s579 = smul.addr %s576, 2
        %s580 = sadd.s32 %s578, %s579
        %s581 = smul.addr %s580, 4
        %s582 = scalar_lea.vmem %s7, %s581
      $region60: #{attention_block_forward.1} parent=55 // pred_fallthru
        _
    $region56: #{attention_block_forward.1} parent=5 // pred_fallthru
      _
  $region6: #{attention_block_forward.1} parent=0 // loop_footer
    %s18 = sadd.s32 1, %s14
  $region7: #{attention_block_forward.1} parent=0 // loop_footer_branch
    %13 = sbr.rel target = $region3
  $region8: #{attention_block_forward.1} parent=0 // loop_exit
    _

</llo_original>
